<compile_context>
chip_gen: v5e
topology: v5e:2x2
jax: 0.10.0
libtpu: 0.0.40
codegen_flags: <defaults>
</compile_context>

<pallas_src>
import functools
import math

import jax
import jax.numpy as jnp
from jax.experimental import pallas as pl
from jax.experimental.pallas import tpu as pltpu

_MiB = 1024 * 1024
_VMEM_CAP = 48 * _MiB          # scoped-VMEM ceiling: safe under v7x's 64 MiB physical


# ----------------------------------------------------------------------------
# Kernels
# ----------------------------------------------------------------------------

def _smooth_l1(x, t, beta):
    # Reference: target = where(isnan(target), input, target); diff = input - target
    # Folded:    diff   = where(isnan(target), 0, input - target)
    diff = jnp.where(jnp.isnan(t), 0.0, x - t)
    n = jnp.abs(diff)
    if beta < 1e-5:                          # compile-time branch (beta is Python float)
        return n
    return jnp.where(n < beta, (n * n) * (0.5 / beta), n - 0.5 * beta)


def _kernel_plain(x_ref, t_ref, o_ref, *, beta):
    x = x_ref[...].astype(jnp.float32)
    t = t_ref[...].astype(jnp.float32)
    o_ref[...] = _smooth_l1(x, t, beta).astype(o_ref.dtype)


def _kernel_weighted_elementwise(x_ref, t_ref, w_ref, o_ref, *, beta):
    # Fallback path: weights already expanded to the same (tr, L) layout as x/t.
    x = x_ref[...].astype(jnp.float32)
    t = t_ref[...].astype(jnp.float32)
    w = w_ref[...].astype(jnp.float32)
    o_ref[...] = (_smooth_l1(x, t, beta) * w).astype(o_ref.dtype)


def _kernel_weighted_mxu(x_ref, t_ref, w_ref, o_ref, *, beta, codes):
    # w_ref holds ONE weight per `codes` consecutive lanes: shape (tr, L//codes).
    # Expand it to (tr, L) with a one-hot replication matmul on the (otherwise
    # idle) MXU:  w_full[r, l] = w[r, l // codes].
    x = x_ref[...].astype(jnp.float32)
    t = t_ref[...].astype(jnp.float32)
    w = w_ref[...].astype(jnp.float32)
    k = w.shape[-1]
    l = x.shape[-1]
    col = jax.lax.broadcasted_iota(jnp.int32, (k, l), 1) // codes
    row = jax.lax.broadcasted_iota(jnp.int32, (k, l), 0)
    rep = (col == row).astype(jnp.float32)            # (k, l) one-hot, tiny
    w_full = jax.lax.dot_general(
        w, rep, (((1,), (0,)), ((), ())),
        preferred_element_type=jnp.float32,
        precision=jax.lax.Precision.HIGHEST)          # exact: one non-zero per column
    o_ref[...] = (_smooth_l1(x, t, beta) * w_full).astype(o_ref.dtype)


# ----------------------------------------------------------------------------
# Tiling helpers
# ----------------------------------------------------------------------------

def _pick_lanes(total, candidates=(2048, 1024, 512, 256, 128)):
    for lanes in candidates:
        if total % lanes == 0:
            return lanes
    return None


def _pick_lanes_weighted(total, codes):
    # Smallest lane width that is a multiple of both 128 and `codes` and divides
    # the flat size; keeps the MXU replication cost (L/codes MACs/elem) negligible.
    base = (128 * codes) // math.gcd(128, codes)
    for mult in (1, 2, 3, 4, 6, 8, 12, 16):
        lanes = base * mult
        if lanes > 4096:
            break
        if total % lanes == 0:
            return lanes
    return None


def _row_tiling(R, row_bytes_streams, *, tmp_blocks, tmp_row_bytes,
                target_block_bytes):
    """Pick a sublane-aligned row tile, grid length, and a VMEM limit."""
    widest = max(row_bytes_streams)
    tr = max(1, int(target_block_bytes) // widest)

    # VMEM budget: each HBM stream double-buffered + ~tmp_blocks block-sized f32
    # temporaries inside the kernel; stay under the 48 MiB scoped cap.
    per_row_vmem = 2 * sum(row_bytes_streams) + tmp_blocks * tmp_row_bytes
    tr = min(tr, max(8, (_VMEM_CAP - 4 * _MiB) // per_row_vmem))

    if tr >= R or R <= 8:
        tr = R                                   # single full-extent block
    else:
        tr = max(8, (tr // 8) * 8)               # sublane multiple

    def _nblk(t):
        return -(-R // t)

    # v7x megacore: prefer >= 2 blocks (ideally an even count) so the "parallel"
    # grid axis can shard across both TensorCores.
    if _nblk(tr) < 2 and R >= 16:
        tr = max(8, (((R + 1) // 2) + 7) // 8 * 8)
    n = _nblk(tr)
    if n > 2 and n % 2 == 1:
        cand = max(8, ((-(-R // (n + 1))) + 7) // 8 * 8)
        if 8 <= cand < tr and _nblk(cand) % 2 == 0:
            tr, n = cand, _nblk(cand)

    vmem_limit = int(min(_VMEM_CAP, max(32 * _MiB, tr * per_row_vmem + 4 * _MiB)))
    return tr, n, vmem_limit


# ----------------------------------------------------------------------------
# Wrappers
# ----------------------------------------------------------------------------

def _elementwise_path(arrays, kernel_fn, beta, out_dtype, shape3,
                      target_block_bytes, tmp_blocks):
    """Lane-dense elementwise path shared by the unweighted and fallback cases."""
    B, A, C = shape3
    total = B * A * C
    L = _pick_lanes(total)
    flats = [a.reshape(-1) for a in arrays]
    pad = 0
    if L is None:
        # Awkward flat size: pad to a multiple of 128 and slice back afterwards.
        L = 128
        padded = -(-total // L) * L
        pad = padded - total
        flats = [jnp.pad(f, (0, pad)) for f in flats]
    R = (total + pad) // L
    args2 = [f.reshape(R, L) for f in flats]

    row_bytes = [L * jnp.dtype(a.dtype).itemsize for a in args2] \
        + [L * jnp.dtype(out_dtype).itemsize]
    tr, nblk, vmem_limit = _row_tiling(
        R, row_bytes, tmp_blocks=tmp_blocks, tmp_row_bytes=L * 4,
        target_block_bytes=target_block_bytes)

    dspec = pl.BlockSpec((tr, L), lambda i: (i, 0))
    out2 = pl.pallas_call(
        functools.partial(kernel_fn, beta=float(beta)),
        out_shape=jax.ShapeDtypeStruct((R, L), out_dtype),
        grid=(nblk,),
        in_specs=[dspec] * len(args2),
        out_specs=dspec,
        compiler_params=pltpu.CompilerParams(
            dimension_semantics=("parallel",),
            vmem_limit_bytes=vmem_limit),
    )(*args2)

    out = out2.reshape(-1)
    if pad:
        out = out[:total]
    return out.reshape(B, A, C)


def _weighted_mxu_path(inp, tgt, w32, beta, out_dtype, L, target_block_bytes):
    B, A, C = inp.shape
    total = B * A * C
    R = total // L
    K = L // C
    x2 = inp.reshape(R, L)
    t2 = tgt.reshape(R, L)
    w2 = w32.reshape(R, K)                      # pure reshape of (B, A): C divides L

    isz = jnp.dtype(inp.dtype).itemsize
    osz = jnp.dtype(out_dtype).itemsize
    row_bytes = [L * isz, L * isz, K * 4, L * osz]
    tr, nblk, vmem_limit = _row_tiling(
        R, row_bytes, tmp_blocks=8, tmp_row_bytes=L * 4,
        target_block_bytes=target_block_bytes)

    dspec = pl.BlockSpec((tr, L), lambda i: (i, 0))
    wspec = pl.BlockSpec((tr, K), lambda i: (i, 0))
    out2 = pl.pallas_call(
        functools.partial(_kernel_weighted_mxu, beta=float(beta), codes=C),
        out_shape=jax.ShapeDtypeStruct((R, L), out_dtype),
        grid=(nblk,),
        in_specs=[dspec, dspec, wspec],
        out_specs=dspec,
        compiler_params=pltpu.CompilerParams(
            dimension_semantics=("parallel",),
            vmem_limit_bytes=vmem_limit),
    )(x2, t2, w2)
    return out2.reshape(B, A, C)


def weighted_smooth_l1_loss(inp, tgt, weights=None, *, beta=1.0 / 9.0,
                            target_block_bytes=4 * _MiB):
    """Un-reduced (B, #anchors, #codes) weighted smooth-L1 loss."""
    B, A, C = inp.shape
    assert tgt.shape == (B, A, C)
    out_dtype = inp.dtype
    total = B * A * C

    if weights is None:
        return _elementwise_path((inp, tgt), _kernel_plain, beta, out_dtype,
                                 (B, A, C), target_block_bytes, tmp_blocks=5)

    assert weights.shape[0] == B and weights.shape[1] == A
    w32 = weights.astype(jnp.float32)           # keep weights in f32 (matches reference)

    L = _pick_lanes_weighted(total, C)
    if L is not None:
        try:
            return _weighted_mxu_path(inp, tgt, w32, beta, out_dtype, L,
                                      target_block_bytes)
        except Exception:
            # Lowering-safety net: fall back to the (slower but proven)
            # pre-broadcast path if the MXU-replication kernel is rejected.
            pass

    # Fallback: pre-broadcast the weights (costs one extra HBM read of the
    # expanded weight stream, but always works for any shape).
    w_full = jnp.broadcast_to(w32[:, :, None], (B, A, C))
    return _elementwise_path((inp, tgt, w_full), _kernel_weighted_elementwise,
                             beta, out_dtype, (B, A, C), target_block_bytes,
                             tmp_blocks=6)


# ----------------------------------------------------------------------------
# Self-test
# ----------------------------------------------------------------------------

if __name__ == "__main__":
    beta = 1.0 / 9.0
    key = jax.random.PRNGKey(0)
    k1, k2, k3, k4 = jax.random.split(key, 4)

    B, A, C = 2, 4096, 8
    inp = jax.random.normal(k1, (B, A, C), dtype=jnp.float32)
    tgt = jax.random.normal(k2, (B, A, C), dtype=jnp.float32) * 0.3
    nan_mask = jax.random.bernoulli(k3, p=0.05, shape=(B, A, C))
    tgt = jnp.where(nan_mask, jnp.nan, tgt)
    weights = jax.random.uniform(k4, (B, A), dtype=jnp.float32)

    def reference(x, t, w, b):
        x = x.astype(jnp.float32)
        t = t.astype(jnp.float32)
        t = jnp.where(jnp.isnan(t), x, t)
        n = jnp.abs(x - t)
        loss = n if b < 1e-5 else jnp.where(n < b, 0.5 * n * n / b, n - 0.5 * b)
        if w is not None:
            loss = loss * w.astype(jnp.float32)[..., None]
        return loss

    # 1) weighted Huber, in-kernel (MXU) weight replication, default blocks.
    out = jax.block_until_ready(weighted_smooth_l1_loss(inp, tgt, weights, beta=beta))
    ref = reference(inp, tgt, weights, beta)
    assert out.shape == (B, A, C)
    assert jnp.allclose(out, ref, atol=1e-6, rtol=1e-5)

    # 2) weighted, small blocks -> longer pipelined grid.
    out2 = jax.block_until_ready(
        weighted_smooth_l1_loss(inp, tgt, weights, beta=beta,
                                target_block_bytes=64 * 1024))
    assert jnp.allclose(out2, ref, atol=1e-6, rtol=1e-5)

    # 3) unweighted, beta < 1e-5 (pure L1) -> specialised 2-stream kernel.
    out3 = jax.block_until_ready(weighted_smooth_l1_loss(inp, tgt, None, beta=0.0))
    assert jnp.allclose(out3, reference(inp, tgt, None, 0.0), atol=1e-6, rtol=1e-5)

    # 4) bf16 inputs: f32 math in-kernel, weights kept in f32.
    out4 = jax.block_until_ready(
        weighted_smooth_l1_loss(inp.astype(jnp.bfloat16), tgt.astype(jnp.bfloat16),
                                weights, beta=beta))
    ref4 = reference(inp.astype(jnp.bfloat16), tgt.astype(jnp.bfloat16), weights, beta)
    assert out4.dtype == jnp.bfloat16
    assert jnp.allclose(out4.astype(jnp.float32), ref4, atol=2e-2, rtol=5e-2)

    # 5) awkward shape (C=7, flat size not a multiple of 128) -> hardened fallback.
    Bs, As, Cs = 2, 96, 7
    kk = jax.random.split(jax.random.PRNGKey(1), 3)
    xs = jax.random.normal(kk[0], (Bs, As, Cs), dtype=jnp.float32)
    ts = jax.random.normal(kk[1], (Bs, As, Cs), dtype=jnp.float32)
    ws = jax.random.uniform(kk[2], (Bs, As), dtype=jnp.float32)
    out5 = jax.block_until_ready(weighted_smooth_l1_loss(xs, ts, ws, beta=beta))
    assert jnp.allclose(out5, reference(xs, ts, ws, beta), atol=1e-6, rtol=1e-5)

    print("KERNEL_OK")
</pallas_src>

<mosaic_0001>
module attributes {stable_mosaic.version = 11 : i64} {
  func.func @_kernel_weighted_elementwise(%arg0: i32, %arg1: memref<16x2048xf32, #tpu.memory_space<vmem>>, %arg2: memref<16x2048xf32, #tpu.memory_space<vmem>>, %arg3: memref<16x2048xf32, #tpu.memory_space<vmem>>, %arg4: memref<16x2048xf32, #tpu.memory_space<vmem>>) attributes {dimension_semantics = [#tpu.dimension_semantics<parallel>], iteration_bounds = array<i64: 2>, scalar_prefetch = 0 : i64, scratch_operands = 0 : i64, tpu.core_type = #tpu.core_type<tc>, window_params = [{transform_indices = @transform_0, window_bounds = array<i64: 16, 2048>}, {transform_indices = @transform_1, window_bounds = array<i64: 16, 2048>}, {transform_indices = @transform_2, window_bounds = array<i64: 16, 2048>}, {transform_indices = @transform_3, window_bounds = array<i64: 16, 2048>}]} {
    %c0 = arith.constant 0 : index
    %c0_0 = arith.constant 0 : index
    %0 = vector.load %arg1[%c0, %c0_0] : memref<16x2048xf32, #tpu.memory_space<vmem>>, vector<16x2048xf32>
    %c0_1 = arith.constant 0 : index
    %c0_2 = arith.constant 0 : index
    %1 = vector.load %arg2[%c0_1, %c0_2] : memref<16x2048xf32, #tpu.memory_space<vmem>>, vector<16x2048xf32>
    %c0_3 = arith.constant 0 : index
    %c0_4 = arith.constant 0 : index
    %2 = vector.load %arg3[%c0_3, %c0_4] : memref<16x2048xf32, #tpu.memory_space<vmem>>, vector<16x2048xf32>
    %3 = arith.cmpf one, %1, %1 : vector<16x2048xf32>
    %4 = arith.subf %0, %1 : vector<16x2048xf32>
    %cst = arith.constant 0.000000e+00 : f32
    %5 = vector.broadcast %cst : f32 to vector<16x2048xf32>
    %6 = arith.select %3, %5, %4 : vector<16x2048xi1>, vector<16x2048xf32>
    %7 = math.absf %6 : vector<16x2048xf32>
    %cst_5 = arith.constant 0.111111112 : f32
    %8 = vector.broadcast %cst_5 : f32 to vector<16x2048xf32>
    %9 = arith.cmpf olt, %7, %8 : vector<16x2048xf32>
    %10 = arith.mulf %7, %7 : vector<16x2048xf32>
    %cst_6 = arith.constant 4.500000e+00 : f32
    %11 = vector.broadcast %cst_6 : f32 to vector<16x2048xf32>
    %12 = arith.mulf %10, %11 : vector<16x2048xf32>
    %cst_7 = arith.constant 0.055555556 : f32
    %13 = vector.broadcast %cst_7 : f32 to vector<16x2048xf32>
    %14 = arith.subf %7, %13 : vector<16x2048xf32>
    %15 = arith.select %9, %12, %14 : vector<16x2048xi1>, vector<16x2048xf32>
    %16 = arith.mulf %15, %2 : vector<16x2048xf32>
    %c0_8 = arith.constant 0 : index
    %c0_9 = arith.constant 0 : index
    %17 = vector.load %arg4[%c0_8, %c0_9] : memref<16x2048xf32, #tpu.memory_space<vmem>>, vector<16x2048xf32>
    tpu.vector_store %arg4[%c0_8, %c0_9], %16 {strides = array<i32>} : memref<16x2048xf32, #tpu.memory_space<vmem>>, vector<16x2048xf32>,
    return
  }
  func.func @transform_0(%arg0: i32) -> (i32, i32) {
    %c0_i32 = arith.constant 0 : i32
    %c0_i32_0 = arith.constant 0 : i32
    return %arg0, %c0_i32 : i32, i32
  }
  func.func @transform_1(%arg0: i32) -> (i32, i32) {
    %c0_i32 = arith.constant 0 : i32
    %c0_i32_0 = arith.constant 0 : i32
    return %arg0, %c0_i32 : i32, i32
  }
  func.func @transform_2(%arg0: i32) -> (i32, i32) {
    %c0_i32 = arith.constant 0 : i32
    %c0_i32_0 = arith.constant 0 : i32
    return %arg0, %c0_i32 : i32, i32
  }
  func.func @transform_3(%arg0: i32) -> (i32, i32) {
    %c0_i32 = arith.constant 0 : i32
    %c0_i32_0 = arith.constant 0 : i32
    return %arg0, %c0_i32 : i32, i32
  }
}

</mosaic_0001>

<llo_original>
// kernel: tpu_custom_call.1
$region0: #{tpu_custom_call.1}
  #allocation0 [shape = 'u32[]', space=smem, size = 0x4, offset = 0x4, fixed_abs, tag = 'smem constant byte address 0x4 - core index']
  #allocation1 [shape = 'u32[72,128]{1,0:T(1,128)}', space=vmem, size = 0x9000, scoped, tag = 'internal scratch']
  %s0 = inlined_call_operand.hbm [shape: f32[32,2048], index: 0, kind: input, shape index: {}]
  %s1 = inlined_call_operand.hbm [shape: f32[32,2048], index: 1, kind: input, shape index: {}]
  %s2 = inlined_call_operand.hbm [shape: f32[32,2048], index: 2, kind: input, shape index: {}]
  %s3 = inlined_call_operand.hbm [shape: f32[32,2048], index: 3, kind: output, shape index: {}]
  %s4 = sld [smem:[#allocation0]]
  $region57: #{tpu_custom_call.1} parent=0
    _
  %s6 = ssub.s32 1, %s4
  %s7 = scalar_select 0, %s6, %s4
  $region1: #{tpu_custom_call.1} parent=0
    #allocation2 [shape = 'u8[262144]{0}', space=vmem, size = 0x40000, scoped, tag = 'input window, operand 0']
    #allocation3 [shape = 's32[2]{0}', space=sflag, size = 0x8, scoped, tag = 'scoped memory for tpu_custom_call.1']
    #allocation4 [shape = 's32[2]{0}', space=sflag, size = 0x8, scoped, tag = 'scoped memory for tpu_custom_call.1']
    #allocation5 [shape = 'u8[262144]{0}', space=vmem, size = 0x40000, scoped, tag = 'input window, operand 1']
    #allocation6 [shape = 's32[2]{0}', space=sflag, size = 0x8, scoped, tag = 'scoped memory for tpu_custom_call.1']
    #allocation7 [shape = 'u8[262144]{0}', space=vmem, size = 0x40000, scoped, tag = 'input window, operand 2']
    #allocation8 [shape = 'u8[262144]{0}', space=vmem, size = 0x40000, scoped, tag = 'output window, operand 0']
    %8 = vsyncpa [#allocation3], 0
    %s9 = scalar_lea.sflag [#allocation3], 1
    %10 = vsyncpa %s9, 0
    %11 = vsyncpa [#allocation6], 0
    %s12 = scalar_lea.sflag [#allocation6], 1
    %13 = vsyncpa %s12, 0
    %14 = vsyncpa [#allocation4], 0
    %s15 = scalar_lea.sflag [#allocation4], 1
    %16 = vsyncpa %s15, 0
    loop: start=0, step=1, limit=4
    $region2: #{tpu_custom_call.1} parent=1 // loop_pre_header
      _
    $region3: #{tpu_custom_call.1} parent=1 // loop_header
      %s18 = sphi 0, %s22
      %p19 = scmp.ge.s32.totalorder %s18, 4
      %s28 = sphi 0, %s30
      %s31 = sphi 0, %s28
      %s32 = sphi 0, %s31
      %s48 = sphi 0, %s32
      %s54 = sphi 0, %s56
      %s57 = sphi 0, %s54
      %s58 = sphi 0, %s57
      %s74 = sphi 0, %s58
      %s80 = sphi 0, %s82
      %s83 = sphi 0, %s80
      %s84 = sphi 0, %s83
      %s100 = sphi 0, %s84
      %s106 = sphi 0, %s108
      %s109 = sphi 0, %s106
      %s110 = sphi 0, %s109
      %s126 = sphi 0, %s110
    $region4: #{tpu_custom_call.1} parent=1 // loop_header_branch
      %21 = sbr.rel (%p19) target = $region8
    $region5: #{tpu_custom_call.1} parent=1 // loop_body
      %s23 = ssub.s32 %s18, 1
      %s24 = ssub.s32 %s18, 2
      %s25 = sadd.s32 %s18, 1
      %s26 = ssub.s32 %s18, %s25
      %p27 = scmp.eq.s32.totalorder %s26, 0
      %s29 = sadd.s32 %s28, 1
      %s30 = scalar_select %p27, %s28, %s29
      %p33 = pneg %p27
      %p34 = scmp.eq.s32.totalorder %s18, 1
      %p35 = por %p33, %p34
      %p36 = scmp.ne.s32.totalorder %s28, %s31
      %p37 = scmp.eq.s32.totalorder %s18, 0
      %p38 = por %p36, %p37
      %p39 = scmp.ne.s32.totalorder %s28, %s31
      %p40 = scmp.eq.s32.totalorder %s23, 1
      %p41 = por %p39, %p40
      %p42 = scmp.ne.s32.totalorder %s31, %s32
      %p43 = scmp.eq.s32.totalorder %s23, 0
      %p44 = por %p42, %p43
      %p45 = scmp.ne.s32.totalorder %s31, %s32
      %p46 = scmp.eq.s32.totalorder %s24, 1
      %p47 = por %p45, %p46
      %p49 = scmp.ne.s32.totalorder %s32, %s48
      %p50 = scmp.eq.s32.totalorder %s24, 0
      %p51 = por %p49, %p50
      %s52 = ssub.s32 %s18, %s25
      %p53 = scmp.eq.s32.totalorder %s52, 0
      %s55 = sadd.s32 %s54, 1
      %s56 = scalar_select %p53, %s54, %s55
      %p59 = pneg %p53
      %p60 = scmp.eq.s32.totalorder %s18, 1
      %p61 = por %p59, %p60
      %p62 = scmp.ne.s32.totalorder %s54, %s57
      %p63 = scmp.eq.s32.totalorder %s18, 0
      %p64 = por %p62, %p63
      %p65 = scmp.ne.s32.totalorder %s54, %s57
      %p66 = scmp.eq.s32.totalorder %s23, 1
      %p67 = por %p65, %p66
      %p68 = scmp.ne.s32.totalorder %s57, %s58
      %p69 = scmp.eq.s32.totalorder %s23, 0
      %p70 = por %p68, %p69
      %p71 = scmp.ne.s32.totalorder %s57, %s58
      %p72 = scmp.eq.s32.totalorder %s24, 1
      %p73 = por %p71, %p72
      %p75 = scmp.ne.s32.totalorder %s58, %s74
      %p76 = scmp.eq.s32.totalorder %s24, 0
      %p77 = por %p75, %p76
      %s78 = ssub.s32 %s18, %s25
      %p79 = scmp.eq.s32.totalorder %s78, 0
      %s81 = sadd.s32 %s80, 1
      %s82 = scalar_select %p79, %s80, %s81
      %p85 = pneg %p79
      %p86 = scmp.eq.s32.totalorder %s18, 1
      %p87 = por %p85, %p86
      %p88 = scmp.ne.s32.totalorder %s80, %s83
      %p89 = scmp.eq.s32.totalorder %s18, 0
      %p90 = por %p88, %p89
      %p91 = scmp.ne.s32.totalorder %s80, %s83
      %p92 = scmp.eq.s32.totalorder %s23, 1
      %p93 = por %p91, %p92
      %p94 = scmp.ne.s32.totalorder %s83, %s84
      %p95 = scmp.eq.s32.totalorder %s23, 0
      %p96 = por %p94, %p95
      %p97 = scmp.ne.s32.totalorder %s83, %s84
      %p98 = scmp.eq.s32.totalorder %s24, 1
      %p99 = por %p97, %p98
      %p101 = scmp.ne.s32.totalorder %s84, %s100
      %p102 = scmp.eq.s32.totalorder %s24, 0
      %p103 = por %p101, %p102
      %s104 = ssub.s32 %s18, %s25
      %p105 = scmp.eq.s32.totalorder %s104, 0
      %s107 = sadd.s32 %s106, 1
      %s108 = scalar_select %p105, %s106, %s107
      %p111 = pneg %p105
      %p112 = scmp.eq.s32.totalorder %s18, 1
      %p113 = por %p111, %p112
      %p114 = scmp.ne.s32.totalorder %s106, %s109
      %p115 = scmp.eq.s32.totalorder %s18, 0
      %p116 = por %p114, %p115
      %p117 = scmp.ne.s32.totalorder %s106, %s109
      %p118 = scmp.eq.s32.totalorder %s23, 1
      %p119 = por %p117, %p118
      %p120 = scmp.ne.s32.totalorder %s109, %s110
      %p121 = scmp.eq.s32.totalorder %s23, 0
      %p122 = por %p120, %p121
      %p123 = scmp.ne.s32.totalorder %s109, %s110
      %p124 = scmp.eq.s32.totalorder %s24, 1
      %p125 = por %p123, %p124
      %p127 = scmp.ne.s32.totalorder %s110, %s126
      %p128 = scmp.eq.s32.totalorder %s24, 0
      %p129 = por %p127, %p128
      %p130 = scmp.le.s32.totalorder 1, %s18
      %p131 = scmp.lt.s32.totalorder %s18, 3
      %p132 = pnand %p130, %p131
      %p133 = pneg %p132
      // Predicated region
      $region9: #{tpu_custom_call.1} parent=5 // pred_check
        _
      $region10: #{tpu_custom_call.1} parent=5 // pred_check_branch
        %135 = sbr.rel (%p132) target = $region12
      $region11: #{tpu_custom_call.1} parent=5 // pred_region
        %s136 = ssub.s32 %s18, 1
      $region12: #{tpu_custom_call.1} parent=5 // pred_fallthru
        _
      %p137 = scmp.lt.s32.totalorder %s18, 2
      // Predicated region
      $region13: #{tpu_custom_call.1} parent=5 // pred_check
        %p138 = pneg %p137
      $region14: #{tpu_custom_call.1} parent=5 // pred_check_branch
        %140 = sbr.rel (%p138) target = $region16
      $region15: #{tpu_custom_call.1} parent=5 // pred_region
        // Predicated region
        $region17: #{tpu_custom_call.1} parent=15 // pred_check
          %p141 = pneg %p38
        $region18: #{tpu_custom_call.1} parent=15 // pred_check_branch
          %143 = sbr.rel (%p141) target = $region20
        $region19: #{tpu_custom_call.1} parent=15 // pred_region
          %s144 = sand.u32 %s28, 1
          %s145 = scalar_lea.sflag [#allocation3], %s144
          %s146 = sand.u32 %s28, 1
          %s147 = smul.addr %s146, 256
          %s148 = scalar_lea.vmem [#allocation2], %s147
          %s149 = smul.u32 2, %s18
          %151 = vsyncadd %s145, 0
          %s152 = smul.addr %s149, 16
          %s153 = smul.addr %s152, 8
          %s154 = scalar_lea.hbm %s0, %s153
          %s155 = sshll.u32 %s154, 4
          %s156 = int_to_ptr.hbm [resolvable:$true] %s155
          %s157 = sshll.u32 %s148, 4
          %s158 = int_to_ptr.vmem [resolvable:$true] %s157
          %163 = dma.hbm_to_vmem [thread:$0]  %s156, 4096, %s158, %s145, 2048, 2048, 128
        $region20: #{tpu_custom_call.1} parent=15 // pred_fallthru
          _
        // Predicated region
        $region21: #{tpu_custom_call.1} parent=15 // pred_check
          %p164 = pneg %p64
        $region22: #{tpu_custom_call.1} parent=15 // pred_check_branch
          %166 = sbr.rel (%p164) target = $region24
        $region23: #{tpu_custom_call.1} parent=15 // pred_region
          %s167 = sand.u32 %s18, 1
          %s168 = scalar_lea.sflag [#allocation6], %s167
          %s169 = sand.u32 %s54, 1
          %s170 = smul.addr %s169, 256
          %s171 = scalar_lea.vmem [#allocation5], %s170
          %s172 = smul.u32 2, %s18
          %174 = vsyncadd %s168, 0
          %s175 = smul.addr %s172, 16
          %s176 = smul.addr %s175, 8
          %s177 = scalar_lea.hbm %s1, %s176
          %s178 = sshll.u32 %s177, 4
          %s179 = int_to_ptr.hbm [resolvable:$true] %s178
          %s180 = sshll.u32 %s171, 4
          %s181 = int_to_ptr.vmem [resolvable:$true] %s180
          %186 = dma.hbm_to_vmem [thread:$0]  %s179, 4096, %s181, %s168, 2048, 2048, 128
        $region24: #{tpu_custom_call.1} parent=15 // pred_fallthru
          _
        // Predicated region
        $region25: #{tpu_custom_call.1} parent=15 // pred_check
          %p187 = pneg %p90
        $region26: #{tpu_custom_call.1} parent=15 // pred_check_branch
          %189 = sbr.rel (%p187) target = $region28
        $region27: #{tpu_custom_call.1} parent=15 // pred_region
          %s190 = sand.u32 %s18, 1
          %s191 = scalar_lea.sflag [#allocation6], %s190
          %s192 = sand.u32 %s80, 1
          %s193 = smul.addr %s192, 256
          %s194 = scalar_lea.vmem [#allocation7], %s193
          %s195 = smul.u32 2, %s18
          %197 = vsyncadd %s191, 0
          %s198 = smul.addr %s195, 16
          %s199 = smul.addr %s198, 8
          %s200 = scalar_lea.hbm %s2, %s199
          %s201 = sshll.u32 %s200, 4
          %s202 = int_to_ptr.hbm [resolvable:$true] %s201
          %s203 = sshll.u32 %s194, 4
          %s204 = int_to_ptr.vmem [resolvable:$true] %s203
          %209 = dma.hbm_to_vmem [thread:$0]  %s202, 4096, %s204, %s191, 2048, 2048, 128
        $region28: #{tpu_custom_call.1} parent=15 // pred_fallthru
          _
      $region16: #{tpu_custom_call.1} parent=5 // pred_fallthru
        _
      %p210 = scmp.le.s32.totalorder 1, %s18
      %p211 = scmp.lt.s32.totalorder %s18, 3
      %p212 = pnand %p210, %p211
      %p213 = pneg %p212
      // Predicated region
      $region29: #{tpu_custom_call.1} parent=5 // pred_check
        _
      $region30: #{tpu_custom_call.1} parent=5 // pred_check_branch
        %215 = sbr.rel (%p212) target = $region32
      $region31: #{tpu_custom_call.1} parent=5 // pred_region
        %s216 = ssub.s32 %s18, 1
        %s217 = sand.u32 %s31, 1
        %s218 = scalar_lea.sflag [#allocation3], %s217
        %s219 = sand.u32 %s31, 1
        %s220 = smul.addr %s219, 256
        %s221 = scalar_lea.vmem [#allocation2], %s220
        // Predicated region
        $region33: #{tpu_custom_call.1} parent=31 // pred_check
          %p222 = pneg %p44
        $region34: #{tpu_custom_call.1} parent=31 // pred_check_branch
          %224 = sbr.rel (%p222) target = $region36
        $region35: #{tpu_custom_call.1} parent=31 // pred_region
          %226 = dma.done %s218, 4096
        $region36: #{tpu_custom_call.1} parent=31 // pred_fallthru
          _
        %s227 = sand.u32 %s23, 1
        %s228 = scalar_lea.sflag [#allocation6], %s227
        %s229 = sand.u32 %s57, 1
        %s230 = smul.addr %s229, 256
        %s231 = scalar_lea.vmem [#allocation5], %s230
        // Predicated region
        $region37: #{tpu_custom_call.1} parent=31 // pred_check
          %p232 = pneg %p70
        $region38: #{tpu_custom_call.1} parent=31 // pred_check_branch
          %234 = sbr.rel (%p232) target = $region40
        $region39: #{tpu_custom_call.1} parent=31 // pred_region
          %236 = dma.done %s228, 4096
        $region40: #{tpu_custom_call.1} parent=31 // pred_fallthru
          _
        %s237 = sand.u32 %s23, 1
        %s238 = scalar_lea.sflag [#allocation6], %s237
        %s239 = sand.u32 %s83, 1
        %s240 = smul.addr %s239, 256
        %s241 = scalar_lea.vmem [#allocation7], %s240
        // Predicated region
        $region41: #{tpu_custom_call.1} parent=31 // pred_check
          %p242 = pneg %p96
        $region42: #{tpu_custom_call.1} parent=31 // pred_check_branch
          %244 = sbr.rel (%p242) target = $region44
        $region43: #{tpu_custom_call.1} parent=31 // pred_region
          %246 = dma.done %s238, 4096
        $region44: #{tpu_custom_call.1} parent=31 // pred_fallthru
          _
        %s247 = sand.u32 %s31, 1
        %s248 = scalar_lea.sflag [#allocation3], %s247
        %s249 = sand.u32 %s31, 1
        %s250 = smul.addr %s249, 256
        %s251 = scalar_lea.vmem [#allocation2], %s250
        %p252 = pneg %p44
        %p253 = pneg %p41
        %s254 = sand.u32 %s23, 1
        %s255 = scalar_lea.sflag [#allocation6], %s254
        %s256 = sand.u32 %s57, 1
        %s257 = smul.addr %s256, 256
        %s258 = scalar_lea.vmem [#allocation5], %s257
        %p259 = pneg %p70
        %p260 = pneg %p67
        %s261 = sand.u32 %s23, 1
        %s262 = scalar_lea.sflag [#allocation6], %s261
        %s263 = sand.u32 %s83, 1
        %s264 = smul.addr %s263, 256
        %s265 = scalar_lea.vmem [#allocation7], %s264
        %p266 = pneg %p96
        %p267 = pneg %p93
        %p268 = pneg %p122
        %p269 = pneg %p119
        %s270 = sand.u32 %s109, 1
        %s271 = scalar_lea.sflag [#allocation4], %s270
        %s272 = sand.u32 %s109, 1
        %s273 = smul.addr %s272, 256
        %s274 = scalar_lea.vmem [#allocation8], %s273
        %s275 = smul.u32 2, %s23
        %s276 = smul.u32 2, %s23
        %s277 = smul.u32 2, %s23
        %s278 = smul.u32 2, %s23
        %v279 = vld [vmem:[%s221] sm:$0xff]
        %v280 = vld [vmem:[%s221 + $0x8] sm:$0xff]
        %v281 = vld [vmem:[%s221 + $0x10] sm:$0xff]
        %v282 = vld [vmem:[%s221 + $0x18] sm:$0xff]
        %v283 = vld [vmem:[%s221 + $0x20] sm:$0xff]
        %v284 = vld [vmem:[%s221 + $0x28] sm:$0xff]
        %v285 = vld [vmem:[%s221 + $0x30] sm:$0xff]
        %v286 = vld [vmem:[%s221 + $0x38] sm:$0xff]
        %v287 = vld [vmem:[%s221 + $0x40] sm:$0xff]
        %v288 = vld [vmem:[%s221 + $0x48] sm:$0xff]
        %v289 = vld [vmem:[%s221 + $0x50] sm:$0xff]
        %v290 = vld [vmem:[%s221 + $0x58] sm:$0xff]
        %v291 = vld [vmem:[%s221 + $0x60] sm:$0xff]
        %v292 = vld [vmem:[%s221 + $0x68] sm:$0xff]
        %v293 = vld [vmem:[%s221 + $0x70] sm:$0xff]
        %v294 = vld [vmem:[%s221 + $0x78] sm:$0xff]
        %v295 = vld [vmem:[%s221 + $0x80] sm:$0xff]
        %v296 = vld [vmem:[%s221 + $0x88] sm:$0xff]
        %v297 = vld [vmem:[%s221 + $0x90] sm:$0xff]
        %v298 = vld [vmem:[%s221 + $0x98] sm:$0xff]
        %v299 = vld [vmem:[%s221 + $0xa0] sm:$0xff]
        %v300 = vld [vmem:[%s221 + $0xa8] sm:$0xff]
        %v301 = vld [vmem:[%s221 + $0xb0] sm:$0xff]
        %v302 = vld [vmem:[%s221 + $0xb8] sm:$0xff]
        %v303 = vld [vmem:[%s221 + $0xc0] sm:$0xff]
        %v304 = vld [vmem:[%s221 + $0xc8] sm:$0xff]
        %v305 = vld [vmem:[%s221 + $0xd0] sm:$0xff]
        %v306 = vld [vmem:[%s221 + $0xd8] sm:$0xff]
        %v307 = vld [vmem:[%s221 + $0xe0] sm:$0xff]
        %v308 = vld [vmem:[%s221 + $0xe8] sm:$0xff]
        %v309 = vld [vmem:[%s221 + $0xf0] sm:$0xff]
        %v310 = vld [vmem:[%s221 + $0xf8] sm:$0xff]
        %v311 = vld [vmem:[%s231] sm:$0xff]
        %v312 = vld [vmem:[%s231 + $0x8] sm:$0xff]
        %v313 = vld [vmem:[%s231 + $0x10] sm:$0xff]
        %v314 = vld [vmem:[%s231 + $0x18] sm:$0xff]
        %v315 = vld [vmem:[%s231 + $0x20] sm:$0xff]
        %v316 = vld [vmem:[%s231 + $0x28] sm:$0xff]
        %v317 = vld [vmem:[%s231 + $0x30] sm:$0xff]
        %v318 = vld [vmem:[%s231 + $0x38] sm:$0xff]
        %v319 = vld [vmem:[%s231 + $0x40] sm:$0xff]
        %v320 = vld [vmem:[%s231 + $0x48] sm:$0xff]
        %v321 = vld [vmem:[%s231 + $0x50] sm:$0xff]
        %v322 = vld [vmem:[%s231 + $0x58] sm:$0xff]
        %v323 = vld [vmem:[%s231 + $0x60] sm:$0xff]
        %v324 = vld [vmem:[%s231 + $0x68] sm:$0xff]
        %v325 = vld [vmem:[%s231 + $0x70] sm:$0xff]
        %v326 = vld [vmem:[%s231 + $0x78] sm:$0xff]
        %v327 = vld [vmem:[%s231 + $0x80] sm:$0xff]
        %v328 = vld [vmem:[%s231 + $0x88] sm:$0xff]
        %v329 = vld [vmem:[%s231 + $0x90] sm:$0xff]
        %v330 = vld [vmem:[%s231 + $0x98] sm:$0xff]
        %v331 = vld [vmem:[%s231 + $0xa0] sm:$0xff]
        %v332 = vld [vmem:[%s231 + $0xa8] sm:$0xff]
        %v333 = vld [vmem:[%s231 + $0xb0] sm:$0xff]
        %v334 = vld [vmem:[%s231 + $0xb8] sm:$0xff]
        %v335 = vld [vmem:[%s231 + $0xc0] sm:$0xff]
        %v336 = vld [vmem:[%s231 + $0xc8] sm:$0xff]
        %v337 = vld [vmem:[%s231 + $0xd0] sm:$0xff]
        %v338 = vld [vmem:[%s231 + $0xd8] sm:$0xff]
        %v339 = vld [vmem:[%s231 + $0xe0] sm:$0xff]
        %v340 = vld [vmem:[%s231 + $0xe8] sm:$0xff]
        %v341 = vld [vmem:[%s231 + $0xf0] sm:$0xff]
        %v342 = vld [vmem:[%s231 + $0xf8] sm:$0xff]
        %v343 = vld [vmem:[%s241] sm:$0xff]
        %v344 = vld [vmem:[%s241 + $0x8] sm:$0xff]
        %v345 = vld [vmem:[%s241 + $0x10] sm:$0xff]
        %v346 = vld [vmem:[%s241 + $0x18] sm:$0xff]
        %v347 = vld [vmem:[%s241 + $0x20] sm:$0xff]
        %v348 = vld [vmem:[%s241 + $0x28] sm:$0xff]
        %v349 = vld [vmem:[%s241 + $0x30] sm:$0xff]
        %v350 = vld [vmem:[%s241 + $0x38] sm:$0xff]
        %v351 = vld [vmem:[%s241 + $0x40] sm:$0xff]
        %v352 = vld [vmem:[%s241 + $0x48] sm:$0xff]
        %v353 = vld [vmem:[%s241 + $0x50] sm:$0xff]
        %v354 = vld [vmem:[%s241 + $0x58] sm:$0xff]
        %v355 = vld [vmem:[%s241 + $0x60] sm:$0xff]
        %v356 = vld [vmem:[%s241 + $0x68] sm:$0xff]
        %v357 = vld [vmem:[%s241 + $0x70] sm:$0xff]
        %v358 = vld [vmem:[%s241 + $0x78] sm:$0xff]
        %v359 = vld [vmem:[%s241 + $0x80] sm:$0xff]
        %v360 = vld [vmem:[%s241 + $0x88] sm:$0xff]
        %v361 = vld [vmem:[%s241 + $0x90] sm:$0xff]
        %v362 = vld [vmem:[%s241 + $0x98] sm:$0xff]
        %v363 = vld [vmem:[%s241 + $0xa0] sm:$0xff]
        %v364 = vld [vmem:[%s241 + $0xa8] sm:$0xff]
        %v365 = vld [vmem:[%s241 + $0xb0] sm:$0xff]
        %v366 = vld [vmem:[%s241 + $0xb8] sm:$0xff]
        %v367 = vld [vmem:[%s241 + $0xc0] sm:$0xff]
        %v368 = vld [vmem:[%s241 + $0xc8] sm:$0xff]
        %v369 = vld [vmem:[%s241 + $0xd0] sm:$0xff]
        %v370 = vld [vmem:[%s241 + $0xd8] sm:$0xff]
        %v371 = vld [vmem:[%s241 + $0xe0] sm:$0xff]
        %v372 = vld [vmem:[%s241 + $0xe8] sm:$0xff]
        %v373 = vld [vmem:[%s241 + $0xf0] sm:$0xff]
        %v374 = vld [vmem:[%s241 + $0xf8] sm:$0xff]
        %vm375 = vcmp.ne.f32.partialorder %v311, %v311
        %vm376 = vcmp.ne.f32.partialorder %v312, %v312
        %vm377 = vcmp.ne.f32.partialorder %v313, %v313
        %vm378 = vcmp.ne.f32.partialorder %v314, %v314
        %vm379 = vcmp.ne.f32.partialorder %v315, %v315
        %vm380 = vcmp.ne.f32.partialorder %v316, %v316
        %vm381 = vcmp.ne.f32.partialorder %v317, %v317
        %vm382 = vcmp.ne.f32.partialorder %v318, %v318
        %vm383 = vcmp.ne.f32.partialorder %v319, %v319
        %vm384 = vcmp.ne.f32.partialorder %v320, %v320
        %vm385 = vcmp.ne.f32.partialorder %v321, %v321
        %vm386 = vcmp.ne.f32.partialorder %v322, %v322
        %vm387 = vcmp.ne.f32.partialorder %v323, %v323
        %vm388 = vcmp.ne.f32.partialorder %v324, %v324
        %vm389 = vcmp.ne.f32.partialorder %v325, %v325
        %vm390 = vcmp.ne.f32.partialorder %v326, %v326
        %vm391 = vcmp.ne.f32.partialorder %v327, %v327
        %vm392 = vcmp.ne.f32.partialorder %v328, %v328
        %vm393 = vcmp.ne.f32.partialorder %v329, %v329
        %vm394 = vcmp.ne.f32.partialorder %v330, %v330
        %vm395 = vcmp.ne.f32.partialorder %v331, %v331
        %vm396 = vcmp.ne.f32.partialorder %v332, %v332
        %vm397 = vcmp.ne.f32.partialorder %v333, %v333
        %vm398 = vcmp.ne.f32.partialorder %v334, %v334
        %vm399 = vcmp.ne.f32.partialorder %v335, %v335
        %vm400 = vcmp.ne.f32.partialorder %v336, %v336
        %vm401 = vcmp.ne.f32.partialorder %v337, %v337
        %vm402 = vcmp.ne.f32.partialorder %v338, %v338
        %vm403 = vcmp.ne.f32.partialorder %v339, %v339
        %vm404 = vcmp.ne.f32.partialorder %v340, %v340
        %vm405 = vcmp.ne.f32.partialorder %v341, %v341
        %vm406 = vcmp.ne.f32.partialorder %v342, %v342
        %v407 = vsub.f32 %v279, %v311
        %v408 = vsub.f32 %v280, %v312
        %v409 = vsub.f32 %v281, %v313
        %v410 = vsub.f32 %v282, %v314
        %v411 = vsub.f32 %v283, %v315
        %v412 = vsub.f32 %v284, %v316
        %v413 = vsub.f32 %v285, %v317
        %v414 = vsub.f32 %v286, %v318
        %v415 = vsub.f32 %v287, %v319
        %v416 = vsub.f32 %v288, %v320
        %v417 = vsub.f32 %v289, %v321
        %v418 = vsub.f32 %v290, %v322
        %v419 = vsub.f32 %v291, %v323
        %v420 = vsub.f32 %v292, %v324
        %v421 = vsub.f32 %v293, %v325
        %v422 = vsub.f32 %v294, %v326
        %v423 = vsub.f32 %v295, %v327
        %v424 = vsub.f32 %v296, %v328
        %v425 = vsub.f32 %v297, %v329
        %v426 = vsub.f32 %v298, %v330
        %v427 = vsub.f32 %v299, %v331
        %v428 = vsub.f32 %v300, %v332
        %v429 = vsub.f32 %v301, %v333
        %v430 = vsub.f32 %v302, %v334
        %v431 = vsub.f32 %v303, %v335
        %v432 = vsub.f32 %v304, %v336
        %v433 = vsub.f32 %v305, %v337
        %v434 = vsub.f32 %v306, %v338
        %v435 = vsub.f32 %v307, %v339
        %v436 = vsub.f32 %v308, %v340
        %v437 = vsub.f32 %v309, %v341
        %v438 = vsub.f32 %v310, %v342
        %v439 = vsel %vm375, 0.0, %v407
        %v440 = vsel %vm376, 0.0, %v408
        %v441 = vsel %vm377, 0.0, %v409
        %v442 = vsel %vm378, 0.0, %v410
        %v443 = vsel %vm379, 0.0, %v411
        %v444 = vsel %vm380, 0.0, %v412
        %v445 = vsel %vm381, 0.0, %v413
        %v446 = vsel %vm382, 0.0, %v414
        %v447 = vsel %vm383, 0.0, %v415
        %v448 = vsel %vm384, 0.0, %v416
        %v449 = vsel %vm385, 0.0, %v417
        %v450 = vsel %vm386, 0.0, %v418
        %v451 = vsel %vm387, 0.0, %v419
        %v452 = vsel %vm388, 0.0, %v420
        %v453 = vsel %vm389, 0.0, %v421
        %v454 = vsel %vm390, 0.0, %v422
        %v455 = vsel %vm391, 0.0, %v423
        %v456 = vsel %vm392, 0.0, %v424
        %v457 = vsel %vm393, 0.0, %v425
        %v458 = vsel %vm394, 0.0, %v426
        %v459 = vsel %vm395, 0.0, %v427
        %v460 = vsel %vm396, 0.0, %v428
        %v461 = vsel %vm397, 0.0, %v429
        %v462 = vsel %vm398, 0.0, %v430
        %v463 = vsel %vm399, 0.0, %v431
        %v464 = vsel %vm400, 0.0, %v432
        %v465 = vsel %vm401, 0.0, %v433
        %v466 = vsel %vm402, 0.0, %v434
        %v467 = vsel %vm403, 0.0, %v435
        %v468 = vsel %vm404, 0.0, %v436
        %v469 = vsel %vm405, 0.0, %v437
        %v470 = vsel %vm406, 0.0, %v438
        %v471 = vand.u32 2147483647, %v439
        %v472 = vand.u32 2147483647, %v440
        %v473 = vand.u32 2147483647, %v441
        %v474 = vand.u32 2147483647, %v442
        %v475 = vand.u32 2147483647, %v443
        %v476 = vand.u32 2147483647, %v444
        %v477 = vand.u32 2147483647, %v445
        %v478 = vand.u32 2147483647, %v446
        %v479 = vand.u32 2147483647, %v447
        %v480 = vand.u32 2147483647, %v448
        %v481 = vand.u32 2147483647, %v449
        %v482 = vand.u32 2147483647, %v450
        %v483 = vand.u32 2147483647, %v451
        %v484 = vand.u32 2147483647, %v452
        %v485 = vand.u32 2147483647, %v453
        %v486 = vand.u32 2147483647, %v454
        %v487 = vand.u32 2147483647, %v455
        %v488 = vand.u32 2147483647, %v456
        %v489 = vand.u32 2147483647, %v457
        %v490 = vand.u32 2147483647, %v458
        %v491 = vand.u32 2147483647, %v459
        %v492 = vand.u32 2147483647, %v460
        %v493 = vand.u32 2147483647, %v461
        %v494 = vand.u32 2147483647, %v462
        %v495 = vand.u32 2147483647, %v463
        %v496 = vand.u32 2147483647, %v464
        %v497 = vand.u32 2147483647, %v465
        %v498 = vand.u32 2147483647, %v466
        %v499 = vand.u32 2147483647, %v467
        %v500 = vand.u32 2147483647, %v468
        %v501 = vand.u32 2147483647, %v469
        %v502 = vand.u32 2147483647, %v470
        %vm503 = vcmp.lt.f32.partialorder %v471, 0.11111111
        %vm504 = vcmp.lt.f32.partialorder %v472, 0.11111111
        %vm505 = vcmp.lt.f32.partialorder %v473, 0.11111111
        %vm506 = vcmp.lt.f32.partialorder %v474, 0.11111111
        %vm507 = vcmp.lt.f32.partialorder %v475, 0.11111111
        %vm508 = vcmp.lt.f32.partialorder %v476, 0.11111111
        %vm509 = vcmp.lt.f32.partialorder %v477, 0.11111111
        %vm510 = vcmp.lt.f32.partialorder %v478, 0.11111111
        %vm511 = vcmp.lt.f32.partialorder %v479, 0.11111111
        %vm512 = vcmp.lt.f32.partialorder %v480, 0.11111111
        %vm513 = vcmp.lt.f32.partialorder %v481, 0.11111111
        %vm514 = vcmp.lt.f32.partialorder %v482, 0.11111111
        %vm515 = vcmp.lt.f32.partialorder %v483, 0.11111111
        %vm516 = vcmp.lt.f32.partialorder %v484, 0.11111111
        %vm517 = vcmp.lt.f32.partialorder %v485, 0.11111111
        %vm518 = vcmp.lt.f32.partialorder %v486, 0.11111111
        %vm519 = vcmp.lt.f32.partialorder %v487, 0.11111111
        %vm520 = vcmp.lt.f32.partialorder %v488, 0.11111111
        %vm521 = vcmp.lt.f32.partialorder %v489, 0.11111111
        %vm522 = vcmp.lt.f32.partialorder %v490, 0.11111111
        %vm523 = vcmp.lt.f32.partialorder %v491, 0.11111111
        %vm524 = vcmp.lt.f32.partialorder %v492, 0.11111111
        %vm525 = vcmp.lt.f32.partialorder %v493, 0.11111111
        %vm526 = vcmp.lt.f32.partialorder %v494, 0.11111111
        %vm527 = vcmp.lt.f32.partialorder %v495, 0.11111111
        %vm528 = vcmp.lt.f32.partialorder %v496, 0.11111111
        %vm529 = vcmp.lt.f32.partialorder %v497, 0.11111111
        %vm530 = vcmp.lt.f32.partialorder %v498, 0.11111111
        %vm531 = vcmp.lt.f32.partialorder %v499, 0.11111111
        %vm532 = vcmp.lt.f32.partialorder %v500, 0.11111111
        %vm533 = vcmp.lt.f32.partialorder %v501, 0.11111111
        %vm534 = vcmp.lt.f32.partialorder %v502, 0.11111111
        %v535 = vmul.f32 %v471, %v471
        %v536 = vmul.f32 %v472, %v472
        %v537 = vmul.f32 %v473, %v473
        %v538 = vmul.f32 %v474, %v474
        %v539 = vmul.f32 %v475, %v475
        %v540 = vmul.f32 %v476, %v476
        %v541 = vmul.f32 %v477, %v477
        %v542 = vmul.f32 %v478, %v478
        %v543 = vmul.f32 %v479, %v479
        %v544 = vmul.f32 %v480, %v480
        %v545 = vmul.f32 %v481, %v481
        %v546 = vmul.f32 %v482, %v482
        %v547 = vmul.f32 %v483, %v483
        %v548 = vmul.f32 %v484, %v484
        %v549 = vmul.f32 %v485, %v485
        %v550 = vmul.f32 %v486, %v486
        %v551 = vmul.f32 %v487, %v487
        %v552 = vmul.f32 %v488, %v488
        %v553 = vmul.f32 %v489, %v489
        %v554 = vmul.f32 %v490, %v490
        %v555 = vmul.f32 %v491, %v491
        %v556 = vmul.f32 %v492, %v492
        %v557 = vmul.f32 %v493, %v493
        %v558 = vmul.f32 %v494, %v494
        %v559 = vmul.f32 %v495, %v495
        %v560 = vmul.f32 %v496, %v496
        %v561 = vmul.f32 %v497, %v497
        %v562 = vmul.f32 %v498, %v498
        %v563 = vmul.f32 %v499, %v499
        %v564 = vmul.f32 %v500, %v500
        %v565 = vmul.f32 %v501, %v501
        %v566 = vmul.f32 %v502, %v502
        %v567 = vmul.f32 %v535, 4.5
        %v568 = vmul.f32 %v536, 4.5
        %v569 = vmul.f32 %v537, 4.5
        %v570 = vmul.f32 %v538, 4.5
        %v571 = vmul.f32 %v539, 4.5
        %v572 = vmul.f32 %v540, 4.5
        %v573 = vmul.f32 %v541, 4.5
        %v574 = vmul.f32 %v542, 4.5
        %v575 = vmul.f32 %v543, 4.5
        %v576 = vmul.f32 %v544, 4.5
        %v577 = vmul.f32 %v545, 4.5
        %v578 = vmul.f32 %v546, 4.5
        %v579 = vmul.f32 %v547, 4.5
        %v580 = vmul.f32 %v548, 4.5
        %v581 = vmul.f32 %v549, 4.5
        %v582 = vmul.f32 %v550, 4.5
        %v583 = vmul.f32 %v551, 4.5
        %v584 = vmul.f32 %v552, 4.5
        %v585 = vmul.f32 %v553, 4.5
        %v586 = vmul.f32 %v554, 4.5
        %v587 = vmul.f32 %v555, 4.5
        %v588 = vmul.f32 %v556, 4.5
        %v589 = vmul.f32 %v557, 4.5
        %v590 = vmul.f32 %v558, 4.5
        %v591 = vmul.f32 %v559, 4.5
        %v592 = vmul.f32 %v560, 4.5
        %v593 = vmul.f32 %v561, 4.5
        %v594 = vmul.f32 %v562, 4.5
        %v595 = vmul.f32 %v563, 4.5
        %v596 = vmul.f32 %v564, 4.5
        %v597 = vmul.f32 %v565, 4.5
        %v598 = vmul.f32 %v566, 4.5
        %v599 = vsub.f32 %v471, 0.055555556
        %v600 = vsub.f32 %v472, 0.055555556
        %v601 = vsub.f32 %v473, 0.055555556
        %v602 = vsub.f32 %v474, 0.055555556
        %v603 = vsub.f32 %v475, 0.055555556
        %v604 = vsub.f32 %v476, 0.055555556
        %v605 = vsub.f32 %v477, 0.055555556
        %v606 = vsub.f32 %v478, 0.055555556
        %v607 = vsub.f32 %v479, 0.055555556
        %v608 = vsub.f32 %v480, 0.055555556
        %v609 = vsub.f32 %v481, 0.055555556
        %v610 = vsub.f32 %v482, 0.055555556
        %v611 = vsub.f32 %v483, 0.055555556
        %v612 = vsub.f32 %v484, 0.055555556
        %v613 = vsub.f32 %v485, 0.055555556
        %v614 = vsub.f32 %v486, 0.055555556
        %v615 = vsub.f32 %v487, 0.055555556
        %v616 = vsub.f32 %v488, 0.055555556
        %v617 = vsub.f32 %v489, 0.055555556
        %v618 = vsub.f32 %v490, 0.055555556
        %v619 = vsub.f32 %v491, 0.055555556
        %v620 = vsub.f32 %v492, 0.055555556
        %v621 = vsub.f32 %v493, 0.055555556
        %v622 = vsub.f32 %v494, 0.055555556
        %v623 = vsub.f32 %v495, 0.055555556
        %v624 = vsub.f32 %v496, 0.055555556
        %v625 = vsub.f32 %v497, 0.055555556
        %v626 = vsub.f32 %v498, 0.055555556
        %v627 = vsub.f32 %v499, 0.055555556
        %v628 = vsub.f32 %v500, 0.055555556
        %v629 = vsub.f32 %v501, 0.055555556
        %v630 = vsub.f32 %v502, 0.055555556
        %v631 = vsel %vm503, %v567, %v599
        %v632 = vsel %vm504, %v568, %v600
        %v633 = vsel %vm505, %v569, %v601
        %v634 = vsel %vm506, %v570, %v602
        %v635 = vsel %vm507, %v571, %v603
        %v636 = vsel %vm508, %v572, %v604
        %v637 = vsel %vm509, %v573, %v605
        %v638 = vsel %vm510, %v574, %v606
        %v639 = vsel %vm511, %v575, %v607
        %v640 = vsel %vm512, %v576, %v608
        %v641 = vsel %vm513, %v577, %v609
        %v642 = vsel %vm514, %v578, %v610
        %v643 = vsel %vm515, %v579, %v611
        %v644 = vsel %vm516, %v580, %v612
        %v645 = vsel %vm517, %v581, %v613
        %v646 = vsel %vm518, %v582, %v614
        %v647 = vsel %vm519, %v583, %v615
        %v648 = vsel %vm520, %v584, %v616
        %v649 = vsel %vm521, %v585, %v617
        %v650 = vsel %vm522, %v586, %v618
        %v651 = vsel %vm523, %v587, %v619
        %v652 = vsel %vm524, %v588, %v620
        %v653 = vsel %vm525, %v589, %v621
        %v654 = vsel %vm526, %v590, %v622
        %v655 = vsel %vm527, %v591, %v623
        %v656 = vsel %vm528, %v592, %v624
        %v657 = vsel %vm529, %v593, %v625
        %v658 = vsel %vm530, %v594, %v626
        %v659 = vsel %vm531, %v595, %v627
        %v660 = vsel %vm532, %v596, %v628
        %v661 = vsel %vm533, %v597, %v629
        %v662 = vsel %vm534, %v598, %v630
        %v663 = vmul.f32 %v631, %v343
        %v664 = vmul.f32 %v632, %v344
        %v665 = vmul.f32 %v633, %v345
        %v666 = vmul.f32 %v634, %v346
        %v667 = vmul.f32 %v635, %v347
        %v668 = vmul.f32 %v636, %v348
        %v669 = vmul.f32 %v637, %v349
        %v670 = vmul.f32 %v638, %v350
        %v671 = vmul.f32 %v639, %v351
        %v672 = vmul.f32 %v640, %v352
        %v673 = vmul.f32 %v641, %v353
        %v674 = vmul.f32 %v642, %v354
        %v675 = vmul.f32 %v643, %v355
        %v676 = vmul.f32 %v644, %v356
        %v677 = vmul.f32 %v645, %v357
        %v678 = vmul.f32 %v646, %v358
        %v679 = vmul.f32 %v647, %v359
        %v680 = vmul.f32 %v648, %v360
        %v681 = vmul.f32 %v649, %v361
        %v682 = vmul.f32 %v650, %v362
        %v683 = vmul.f32 %v651, %v363
        %v684 = vmul.f32 %v652, %v364
        %v685 = vmul.f32 %v653, %v365
        %v686 = vmul.f32 %v654, %v366
        %v687 = vmul.f32 %v655, %v367
        %v688 = vmul.f32 %v656, %v368
        %v689 = vmul.f32 %v657, %v369
        %v690 = vmul.f32 %v658, %v370
        %v691 = vmul.f32 %v659, %v371
        %v692 = vmul.f32 %v660, %v372
        %v693 = vmul.f32 %v661, %v373
        %v694 = vmul.f32 %v662, %v374
        %695 = vst [vmem:[%s274] sm:$0xff] %v663
        %696 = vst [vmem:[%s274 + $0x8] sm:$0xff] %v664
        %697 = vst [vmem:[%s274 + $0x10] sm:$0xff] %v665
        %698 = vst [vmem:[%s274 + $0x18] sm:$0xff] %v666
        %699 = vst [vmem:[%s274 + $0x20] sm:$0xff] %v667
        %700 = vst [vmem:[%s274 + $0x28] sm:$0xff] %v668
        %701 = vst [vmem:[%s274 + $0x30] sm:$0xff] %v669
        %702 = vst [vmem:[%s274 + $0x38] sm:$0xff] %v670
        %703 = vst [vmem:[%s274 + $0x40] sm:$0xff] %v671
        %704 = vst [vmem:[%s274 + $0x48] sm:$0xff] %v672
        %705 = vst [vmem:[%s274 + $0x50] sm:$0xff] %v673
        %706 = vst [vmem:[%s274 + $0x58] sm:$0xff] %v674
        %707 = vst [vmem:[%s274 + $0x60] sm:$0xff] %v675
        %708 = vst [vmem:[%s274 + $0x68] sm:$0xff] %v676
        %709 = vst [vmem:[%s274 + $0x70] sm:$0xff] %v677
        %710 = vst [vmem:[%s274 + $0x78] sm:$0xff] %v678
        %711 = vst [vmem:[%s274 + $0x80] sm:$0xff] %v679
        %712 = vst [vmem:[%s274 + $0x88] sm:$0xff] %v680
        %713 = vst [vmem:[%s274 + $0x90] sm:$0xff] %v681
        %714 = vst [vmem:[%s274 + $0x98] sm:$0xff] %v682
        %715 = vst [vmem:[%s274 + $0xa0] sm:$0xff] %v683
        %716 = vst [vmem:[%s274 + $0xa8] sm:$0xff] %v684
        %717 = vst [vmem:[%s274 + $0xb0] sm:$0xff] %v685
        %718 = vst [vmem:[%s274 + $0xb8] sm:$0xff] %v686
        %719 = vst [vmem:[%s274 + $0xc0] sm:$0xff] %v687
        %720 = vst [vmem:[%s274 + $0xc8] sm:$0xff] %v688
        %721 = vst [vmem:[%s274 + $0xd0] sm:$0xff] %v689
        %722 = vst [vmem:[%s274 + $0xd8] sm:$0xff] %v690
        %723 = vst [vmem:[%s274 + $0xe0] sm:$0xff] %v691
        %724 = vst [vmem:[%s274 + $0xe8] sm:$0xff] %v692
        %725 = vst [vmem:[%s274 + $0xf0] sm:$0xff] %v693
        %726 = vst [vmem:[%s274 + $0xf8] sm:$0xff] %v694
        %s727 = sand.u32 %s109, 1
        %s728 = scalar_lea.sflag [#allocation4], %s727
        %s729 = sand.u32 %s109, 1
        %s730 = smul.addr %s729, 256
        %s731 = scalar_lea.vmem [#allocation8], %s730
        // Predicated region
        $region45: #{tpu_custom_call.1} parent=31 // pred_check
          %p732 = pneg %p119
        $region46: #{tpu_custom_call.1} parent=31 // pred_check_branch
          %734 = sbr.rel (%p732) target = $region48
        $region47: #{tpu_custom_call.1} parent=31 // pred_region
          %s735 = smul.u32 2, %s23
          %737 = vsyncadd %s728, 0
          %s738 = smul.addr %s735, 16
          %s739 = smul.addr %s738, 8
          %s740 = scalar_lea.hbm %s3, %s739
          %s741 = sshll.u32 %s731, 4
          %s742 = int_to_ptr.vmem [resolvable:$true] %s741
          %s743 = sshll.u32 %s740, 4
          %s744 = int_to_ptr.hbm [resolvable:$true] %s743
          %749 = dma.vmem_to_hbm [thread:$0]  %s742, 4096, %s744, %s728, 2048, 2048, 128
        $region48: #{tpu_custom_call.1} parent=31 // pred_fallthru
          _
      $region32: #{tpu_custom_call.1} parent=5 // pred_fallthru
        _
      %p750 = scmp.le.s32.totalorder 2, %s18
      // Predicated region
      $region49: #{tpu_custom_call.1} parent=5 // pred_check
        %p751 = pneg %p750
      $region50: #{tpu_custom_call.1} parent=5 // pred_check_branch
        %753 = sbr.rel (%p751) target = $region52
      $region51: #{tpu_custom_call.1} parent=5 // pred_region
        %s754 = ssub.s32 %s18, 2
        // Predicated region
        $region53: #{tpu_custom_call.1} parent=51 // pred_check
          %p755 = pneg %p125
        $region54: #{tpu_custom_call.1} parent=51 // pred_check_branch
          %757 = sbr.rel (%p755) target = $region56
        $region55: #{tpu_custom_call.1} parent=51 // pred_region
          %s758 = sand.u32 %s110, 1
          %s759 = scalar_lea.sflag [#allocation4], %s758
          %s760 = sand.u32 %s110, 1
          %s761 = smul.addr %s760, 256
          %s762 = scalar_lea.vmem [#allocation8], %s761
          %764 = dma.done %s759, 4096
        $region56: #{tpu_custom_call.1} parent=51 // pred_fallthru
          _
      $region52: #{tpu_custom_call.1} parent=5 // pred_fallthru
        _
    $region6: #{tpu_custom_call.1} parent=1 // loop_footer
      %s22 = sadd.s32 1, %s18
    $region7: #{tpu_custom_call.1} parent=1 // loop_footer_branch
      %17 = sbr.rel target = $region3
    $region8: #{tpu_custom_call.1} parent=1 // loop_exit
      _
    %765 = vsyncpa [#allocation3], 1
    %s766 = scalar_lea.sflag [#allocation3], 1
    %767 = vsyncpa %s766, 1
    %768 = vsyncpa [#allocation6], 1
    %s769 = scalar_lea.sflag [#allocation6], 1
    %770 = vsyncpa %s769, 1
    %771 = vsyncpa [#allocation4], 1
    %s772 = scalar_lea.sflag [#allocation4], 1
    %773 = vsyncpa %s772, 1

</llo_original>
